<compile_context>
chip_gen: v6e
topology: v6e:2x2x1
jax: 0.10.0
libtpu: 0.0.40
codegen_flags: <defaults>
</compile_context>

<pallas_src>
import functools

import jax
import jax.numpy as jnp
import numpy as np
from jax import lax
from jax.experimental import pallas as pl
from jax.experimental.pallas import tpu as pltpu

_EPS = 1e-5


def _block_kernel(x_ref, w1_ref, w2_ref, p_ref, gmat_ref, o_ref,
                  *, Nb, H, W, C_out, G):
    """Processes Nb images per grid step, all in lane-dense (rows, W*C) layout.

    x_ref:    (Nb*H, W*C_in)      rows, lanes pack (column, channel)
    w1_ref:   (W*C_in,  3*W*C_out)  conv1 banded weight (kw taps + padding baked)
    w2_ref:   (W*C_out, 3*W*C_out)  conv2 banded weight
    p_ref:    (4, W*C_out)          packed [b1, gamma, beta, b2] lane-dense params
    gmat_ref: (W*C_out, W*C_out)    group-membership matrix (1 iff same GN group)
    o_ref:    (Nb*H, W*C_out)       lane-dense output
    """
    WCo = W * C_out
    rows = Nb * H
    cg = C_out // G
    inv_cnt = 1.0 / float(H * W * cg)

    # Hoisted row-border masks shared by both convs (kh=+1 reads the row below,
    # kh=-1 the row above; both are zero-filled at the corresponding image edge).
    row_in_img = lax.broadcasted_iota(jnp.int32, (rows, 1), 0) % H
    mask_lo = row_in_img >= 1          # valid rows for the dh = -1 tap
    mask_hi = row_in_img < H - 1       # valid rows for the dh = +1 tap

    b1 = p_ref[0:1, :]
    gamma = p_ref[1:2, :]
    beta = p_ref[2:3, :]
    b2 = p_ref[3:4, :]

    def conv3x3(x2d, w_ref, bias_row):
        # Per-kh dot against a static 128-aligned weight column slice, then a single
        # XLU roll (+ mask) for the row shift; accumulator is bias-initialized.
        acc = jnp.broadcast_to(bias_row, (rows, WCo))
        for kh in range(3):
            dh = kh - 1
            u = jnp.dot(x2d, w_ref[:, kh * WCo:(kh + 1) * WCo],
                        preferred_element_type=jnp.float32)
            if dh != 0:
                u = pltpu.roll(u, (-dh) % rows, 0)          # v[r] = u[r + dh]
                u = jnp.where(mask_hi if dh > 0 else mask_lo, u, 0.0)
            acc = acc + u
        return acc

    # ---------------- conv1 ----------------
    a1 = conv3x3(x_ref[...], w1_ref, b1)                    # (rows, WCo) f32

    # -------- GroupNorm (vectorized over images AND groups) + ReLU --------
    gmat = gmat_ref[...]
    a3 = a1.reshape(Nb, H, WCo)                              # H % 8 -> layout-preserving
    csum = jnp.sum(a3, axis=1)                               # (Nb, WCo)  sublane reduce
    mean = jnp.dot(csum, gmat, preferred_element_type=jnp.float32) * inv_cnt
    d = a3 - mean[:, None, :]
    sqsum = jnp.sum(d * d, axis=1)                           # (Nb, WCo)
    gvar = jnp.dot(sqsum, gmat, preferred_element_type=jnp.float32) * inv_cnt
    inv = lax.rsqrt(gvar + _EPS)                             # (Nb, WCo)  EUP
    h = jnp.maximum(d * inv[:, None, :] * gamma + beta, 0.0).reshape(rows, WCo)

    # ---------------- conv2 + ReLU ----------------
    a2 = conv3x3(h, w2_ref, b2)
    o_ref[...] = jnp.maximum(a2, 0.0)


def _banded_conv_weight(w_oihw, W):
    """(C_out, C_in, 3, 3) OIHW -> (W*C_in, 3*W*C_out) banded weight.

    Column block kh holds sum_kw shift(kw) (x) W[kh, kw]: the kw spatial shift with
    zero padding is baked into the band structure, so a single matmul against it
    yields per-kh partial convolutions directly in lane-dense layout.
    """
    C_out, C_in = w_oihw.shape[0], w_oihw.shape[1]
    taps = jnp.transpose(w_oihw, (2, 3, 1, 0)).astype(jnp.float32)   # (kh, kw, ci, co)
    shift_eyes = jnp.stack(
        [jnp.eye(W, k=1 - kw, dtype=jnp.float32) for kw in range(3)], axis=0)  # (kw,w,v)
    wbig = jnp.einsum('xwv,hxio->wihvo', shift_eyes, taps,
                      precision=lax.Precision.HIGHEST)
    return wbig.reshape(W * C_in, 3 * W * C_out)


def _target_rows_per_step():
    """MXU M-dim target per generation: ~128 on v5e (4x128 MXU), ~256 on v6e/v7x."""
    try:
        kind = jax.devices()[0].device_kind.lower()
    except Exception:
        return 256
    if "v5 lite" in kind or "v5e" in kind or "v5lite" in kind:
        return 128
    return 256


def _pick_batch_block(N, H, target_rows):
    """Largest divisor Nb of N with Nb*H <= target_rows; then shrink (if possible)
    so grid = N // Nb >= 2 (v7x 2-TC sharding + input-DMA/compute overlap)."""
    nb = 1
    for cand in range(1, N + 1):
        if N % cand == 0 and cand * H <= target_rows:
            nb = cand
    if N // nb < 2 and N >= 2:
        for cand in range(nb - 1, 0, -1):
            if N % cand == 0:
                nb = cand
                break
    return nb


def block_forward(x_nchw, params, *, group_size=4, batch_block=None):
    """Pallas implementation of Block.forward. x_nchw: (N, C_in, H, W) f32."""
    w1, b1, gamma, beta, w2, b2 = params
    N, C_in, H, W = x_nchw.shape
    C_out = w1.shape[0]
    G = int(max(1, C_out // group_size))
    assert C_out % G == 0, "GroupNorm requires C_out % num_groups == 0"
    WCi, WCo = W * C_in, W * C_out
    cg = C_out // G

    Nb = (_pick_batch_block(N, H, _target_rows_per_step())
          if batch_block is None else batch_block)
    assert N % Nb == 0

    # Layout glue only (no padding pass): NCHW -> lane-dense (N*H, W*C_in) rows.
    # TODO(synk): if composed with other lane-dense layers, keep NHWC end-to-end and
    # drop this transpose + the final one (each is an extra HBM pass outside the kernel).
    x_ld = (jnp.transpose(x_nchw, (0, 2, 3, 1))
            .reshape(N * H, WCi).astype(jnp.float32))

    wbig1 = _banded_conv_weight(w1, W)        # (WCi, 3*WCo)
    wbig2 = _banded_conv_weight(w2, W)        # (WCo, 3*WCo)

    # Packed lane-dense per-channel params: rows = [b1, gamma, beta, b2].
    pvec = jnp.stack([
        jnp.tile(b1.astype(jnp.float32), W),
        jnp.tile(gamma.astype(jnp.float32), W),
        jnp.tile(beta.astype(jnp.float32), W),
        jnp.tile(b2.astype(jnp.float32), W),
    ], axis=0)                                # (4, WCo)

    # Group-membership matrix: gmat[i, j] = 1 iff lanes i, j are in the same GN group.
    lane_grp = (np.arange(WCo) % C_out) // cg
    gmat = jnp.asarray((lane_grp[:, None] == lane_grp[None, :]).astype(np.float32))

    # VMEM guardrail for the W^2-scaling banded-weight scheme (v7x: 64 MiB physical).
    banded_bytes = 4 * (WCi * 3 * WCo + WCo * 3 * WCo)
    assert banded_bytes <= 24 << 20, (
        "banded conv weights too large for VMEM; use a row-strip grid with a 1-row "
        "halo for W*C_out this large (see TODO(synk) at top of file)")

    # Scoped-VMEM budget: double-buffered in/out blocks + (conservatively double-
    # buffered) resident weights + in-kernel f32 intermediates, with margin.
    est = 2 * 4 * (WCi * 3 * WCo + WCo * 3 * WCo          # banded weights
                   + 2 * Nb * H * (WCi + WCo)             # x / out blocks
                   + WCo * WCo + 4 * WCo)                 # gmat + packed params
    est += 8 * 4 * Nb * H * WCo                           # a1/d/h/acc intermediates
    vmem_limit = int(min(max(est + (4 << 20), 16 << 20), 48 << 20))

    kernel = functools.partial(_block_kernel, Nb=Nb, H=H, W=W, C_out=C_out, G=G)

    out_ld = pl.pallas_call(
        kernel,
        out_shape=jax.ShapeDtypeStruct((N * H, WCo), jnp.float32),
        grid_spec=pltpu.PrefetchScalarGridSpec(
            num_scalar_prefetch=0,
            grid=(N // Nb,),
            in_specs=[
                pl.BlockSpec((Nb * H, WCi), lambda n: (n, 0)),       # x (lane-dense)
                pl.BlockSpec((WCi, 3 * WCo), lambda n: (0, 0)),      # conv1 banded W
                pl.BlockSpec((WCo, 3 * WCo), lambda n: (0, 0)),      # conv2 banded W
                pl.BlockSpec((4, WCo), lambda n: (0, 0)),            # packed params
                pl.BlockSpec((WCo, WCo), lambda n: (0, 0)),          # GN group matrix
            ],
            out_specs=pl.BlockSpec((Nb * H, WCo), lambda n: (n, 0)),  # lane-dense out
        ),
        compiler_params=pltpu.CompilerParams(
            dimension_semantics=("parallel",),
            vmem_limit_bytes=vmem_limit),
    )(x_ld, wbig1, wbig2, pvec, gmat)

    return jnp.transpose(out_ld.reshape(N, H, W, C_out), (0, 3, 1, 2))  # back to NCHW


def block_reference(x_nchw, params, *, group_size=4):
    """Pure-JAX reference (mirrors the PyTorch module semantics)."""
    w1, b1, gamma, beta, w2, b2 = params
    N, C_in, H, W = x_nchw.shape
    C_out = w1.shape[0]
    G = int(max(1, C_out // group_size))

    def conv(x, w, b):
        y = jax.lax.conv_general_dilated(
            x, w, window_strides=(1, 1), padding=((1, 1), (1, 1)),
            dimension_numbers=("NCHW", "OIHW", "NCHW"))
        return y + b[None, :, None, None]

    y = conv(x_nchw, w1, b1)
    yg = y.reshape(N, G, C_out // G, H, W)
    mean = yg.mean(axis=(2, 3, 4), keepdims=True)
    var = yg.var(axis=(2, 3, 4), keepdims=True)
    yn = (yg - mean) / jnp.sqrt(var + _EPS)
    yn = yn.reshape(N, C_out, H, W) * gamma[None, :, None, None] + beta[None, :, None, None]
    h = jax.nn.relu(yn)
    z = conv(h, w2, b2)
    return jax.nn.relu(z)


if __name__ == "__main__":
    N, C_in, C_out, H, W = 2, 4, 8, 16, 16
    group_size = 4

    key = jax.random.PRNGKey(0)
    k1, k2, k3, k4, k5, k6, kx = jax.random.split(key, 7)
    params = (
        0.1 * jax.random.normal(k1, (C_out, C_in, 3, 3), jnp.float32),   # conv1 weight
        0.1 * jax.random.normal(k2, (C_out,), jnp.float32),              # conv1 bias
        1.0 + 0.1 * jax.random.normal(k3, (C_out,), jnp.float32),        # GN weight
        0.1 * jax.random.normal(k4, (C_out,), jnp.float32),              # GN bias
        0.1 * jax.random.normal(k5, (C_out, C_out, 3, 3), jnp.float32),  # conv2 weight
        0.1 * jax.random.normal(k6, (C_out,), jnp.float32),              # conv2 bias
    )
    x = jax.random.normal(kx, (N, C_in, H, W), jnp.float32)

    out = jax.block_until_ready(block_forward(x, params, group_size=group_size))
    ref = jax.block_until_ready(block_reference(x, params, group_size=group_size))

    assert out.shape == (N, C_out, H, W), out.shape
    np.testing.assert_allclose(np.asarray(out), np.asarray(ref), rtol=1e-4, atol=1e-4)
    print("KERNEL_OK")
</pallas_src>

<mosaic_0001>
module attributes {stable_mosaic.version = 11 : i64} {
  func.func @_block_kernel(%arg0: i32, %arg1: memref<16x64xf32, #tpu.memory_space<vmem>>, %arg2: memref<64x384xf32, #tpu.memory_space<vmem>>, %arg3: memref<128x384xf32, #tpu.memory_space<vmem>>, %arg4: memref<4x128xf32, #tpu.memory_space<vmem>>, %arg5: memref<128x128xf32, #tpu.memory_space<vmem>>, %arg6: memref<16x128xf32, #tpu.memory_space<vmem>>) attributes {dimension_semantics = [#tpu.dimension_semantics<parallel>], iteration_bounds = array<i64: 2>, scalar_prefetch = 0 : i64, scratch_operands = 0 : i64, tpu.core_type = #tpu.core_type<tc>, window_params = [{transform_indices = @transform_0, window_bounds = array<i64: 16, 64>}, {pipeline_mode = #tpu.pipeline_mode<synchronous>, transform_indices = @transform_1, window_bounds = array<i64: 64, 384>}, {pipeline_mode = #tpu.pipeline_mode<synchronous>, transform_indices = @transform_2, window_bounds = array<i64: 128, 384>}, {pipeline_mode = #tpu.pipeline_mode<synchronous>, transform_indices = @transform_3, window_bounds = array<i64: 4, 128>}, {pipeline_mode = #tpu.pipeline_mode<synchronous>, transform_indices = @transform_4, window_bounds = array<i64: 128, 128>}, {transform_indices = @transform_5, window_bounds = array<i64: 16, 128>}]} {
    %0 = tpu.iota {dimensions = array<i32: 0>} : vector<16x1xi32>
    %c16_i32 = arith.constant 16 : i32
    %c0_i32 = arith.constant 0 : i32
    %1 = arith.cmpi eq, %c16_i32, %c0_i32 : i32
    %c1_i32 = arith.constant 1 : i32
    %2 = arith.select %1, %c1_i32, %c16_i32 : i32
    %3 = vector.broadcast %2 : i32 to vector<16x1xi32>
    %4 = arith.remsi %0, %3 : vector<16x1xi32>
    %c0_i32_0 = arith.constant 0 : i32
    %5 = vector.broadcast %c0_i32_0 : i32 to vector<16x1xi32>
    %6 = arith.cmpi ne, %4, %5 : vector<16x1xi32>
    %c0_i32_1 = arith.constant 0 : i32
    %7 = vector.broadcast %c0_i32_1 : i32 to vector<16x1xi32>
    %8 = arith.cmpi slt, %4, %7 : vector<16x1xi32>
    %c0_i32_2 = arith.constant 0 : i32
    %9 = arith.cmpi slt, %2, %c0_i32_2 : i32
    %10 = vector.broadcast %9 : i1 to vector<16x1xi1>
    %11 = vector.broadcast %10 : vector<16x1xi1> to vector<16x1xi1>
    %12 = arith.xori %8, %11 : vector<16x1xi1>
    %13 = arith.andi %12, %6 : vector<16x1xi1>
    %14 = vector.broadcast %2 : i32 to vector<16x1xi32>
    %15 = arith.addi %4, %14 : vector<16x1xi32>
    %16 = arith.select %13, %15, %4 : vector<16x1xi1>, vector<16x1xi32>
    %c1_i32_3 = arith.constant 1 : i32
    %17 = vector.broadcast %c1_i32_3 : i32 to vector<16x1xi32>
    %18 = arith.cmpi sge, %16, %17 : vector<16x1xi32>
    %c15_i32 = arith.constant 15 : i32
    %19 = vector.broadcast %c15_i32 : i32 to vector<16x1xi32>
    %20 = arith.cmpi slt, %16, %19 : vector<16x1xi32>
    %c0 = arith.constant 0 : index
    %c0_4 = arith.constant 0 : index
    %21 = vector.load %arg4[%c0, %c0_4] : memref<4x128xf32, #tpu.memory_space<vmem>>, vector<1x128xf32>
    %c1 = arith.constant 1 : index
    %c0_5 = arith.constant 0 : index
    %22 = vector.load %arg4[%c1, %c0_5] : memref<4x128xf32, #tpu.memory_space<vmem>>, vector<1x128xf32>
    %c2 = arith.constant 2 : index
    %c0_6 = arith.constant 0 : index
    %23 = vector.load %arg4[%c2, %c0_6] : memref<4x128xf32, #tpu.memory_space<vmem>>, vector<1x128xf32>
    %c3 = arith.constant 3 : index
    %c0_7 = arith.constant 0 : index
    %24 = vector.load %arg4[%c3, %c0_7] : memref<4x128xf32, #tpu.memory_space<vmem>>, vector<1x128xf32>
    %c0_8 = arith.constant 0 : index
    %c0_9 = arith.constant 0 : index
    %25 = vector.load %arg1[%c0_8, %c0_9] : memref<16x64xf32, #tpu.memory_space<vmem>>, vector<16x64xf32>
    %26 = vector.shape_cast %21 : vector<1x128xf32> to vector<1x128xf32>
    %27 = vector.broadcast %26 : vector<1x128xf32> to vector<16x128xf32>
    %c0_10 = arith.constant 0 : index
    %c0_11 = arith.constant 0 : index
    %28 = vector.load %arg2[%c0_10, %c0_11] : memref<64x384xf32, #tpu.memory_space<vmem>>, vector<64x128xf32>
    %cst = arith.constant dense<0.000000e+00> : vector<16x128xf32>
    %29 = tpu.matmul %25, %28, %cst {dimension_numbers = #tpu.dot_dimension_numbers<[1], [0], [0], [1], [0, 0, 1, 1], [], []>} : vector<16x64xf32>, vector<64x128xf32>, vector<16x128xf32> -> vector<16x128xf32>
    %c1_i32_12 = arith.constant 1 : i32
    %30 = tpu.dynamic_rotate %29 by %c1_i32_12 dim 0 : vector<16x128xf32>, i32 -> vector<16x128xf32>
    %cst_13 = arith.constant 0.000000e+00 : f32
    %31 = vector.shape_cast %18 : vector<16x1xi1> to vector<16x1xi1>
    %32 = vector.broadcast %31 : vector<16x1xi1> to vector<16x128xi1>
    %33 = vector.broadcast %cst_13 : f32 to vector<16x128xf32>
    %34 = arith.select %32, %30, %33 : vector<16x128xi1>, vector<16x128xf32>
    %35 = arith.addf %27, %34 : vector<16x128xf32>
    %c0_14 = arith.constant 0 : index
    %c128 = arith.constant 128 : index
    %36 = vector.load %arg2[%c0_14, %c128] : memref<64x384xf32, #tpu.memory_space<vmem>>, vector<64x128xf32>
    %cst_15 = arith.constant dense<0.000000e+00> : vector<16x128xf32>
    %37 = tpu.matmul %25, %36, %cst_15 {dimension_numbers = #tpu.dot_dimension_numbers<[1], [0], [0], [1], [0, 0, 1, 1], [], []>} : vector<16x64xf32>, vector<64x128xf32>, vector<16x128xf32> -> vector<16x128xf32>
    %38 = arith.addf %35, %37 : vector<16x128xf32>
    %c0_16 = arith.constant 0 : index
    %c256 = arith.constant 256 : index
    %39 = vector.load %arg2[%c0_16, %c256] : memref<64x384xf32, #tpu.memory_space<vmem>>, vector<64x128xf32>
    %cst_17 = arith.constant dense<0.000000e+00> : vector<16x128xf32>
    %40 = tpu.matmul %25, %39, %cst_17 {dimension_numbers = #tpu.dot_dimension_numbers<[1], [0], [0], [1], [0, 0, 1, 1], [], []>} : vector<16x64xf32>, vector<64x128xf32>, vector<16x128xf32> -> vector<16x128xf32>
    %c15_i32_18 = arith.constant 15 : i32
    %41 = tpu.dynamic_rotate %40 by %c15_i32_18 dim 0 : vector<16x128xf32>, i32 -> vector<16x128xf32>
    %cst_19 = arith.constant 0.000000e+00 : f32
    %42 = vector.shape_cast %20 : vector<16x1xi1> to vector<16x1xi1>
    %43 = vector.broadcast %42 : vector<16x1xi1> to vector<16x128xi1>
    %44 = vector.broadcast %cst_19 : f32 to vector<16x128xf32>
    %45 = arith.select %43, %41, %44 : vector<16x128xi1>, vector<16x128xf32>
    %46 = arith.addf %38, %45 : vector<16x128xf32>
    %c0_20 = arith.constant 0 : index
    %c0_21 = arith.constant 0 : index
    %47 = vector.load %arg5[%c0_20, %c0_21] : memref<128x128xf32, #tpu.memory_space<vmem>>, vector<128x128xf32>
    %48 = vector.shape_cast %46 : vector<16x128xf32> to vector<1x16x128xf32>
    %cst_22 = arith.constant dense<0.000000e+00> : vector<1x128xf32>
    %49 = vector.multi_reduction <add>, %48, %cst_22 [1] : vector<1x16x128xf32> to vector<1x128xf32>
    %cst_23 = arith.constant dense<0.000000e+00> : vector<1x128xf32>
    %50 = tpu.matmul %49, %47, %cst_23 {dimension_numbers = #tpu.dot_dimension_numbers<[1], [0], [0], [1], [0, 0, 1, 1], [], []>} : vector<1x128xf32>, vector<128x128xf32>, vector<1x128xf32> -> vector<1x128xf32>
    %cst_24 = arith.constant 9.765625E-4 : f32
    %51 = vector.broadcast %cst_24 : f32 to vector<1x128xf32>
    %52 = arith.mulf %50, %51 : vector<1x128xf32>
    %53 = vector.shape_cast %52 : vector<1x128xf32> to vector<1x1x128xf32>
    %54 = vector.broadcast %53 : vector<1x1x128xf32> to vector<1x16x128xf32>
    %55 = arith.subf %48, %54 : vector<1x16x128xf32>
    %56 = arith.mulf %55, %55 : vector<1x16x128xf32>
    %cst_25 = arith.constant dense<0.000000e+00> : vector<1x128xf32>
    %57 = vector.multi_reduction <add>, %56, %cst_25 [1] : vector<1x16x128xf32> to vector<1x128xf32>
    %cst_26 = arith.constant dense<0.000000e+00> : vector<1x128xf32>
    %58 = tpu.matmul %57, %47, %cst_26 {dimension_numbers = #tpu.dot_dimension_numbers<[1], [0], [0], [1], [0, 0, 1, 1], [], []>} : vector<1x128xf32>, vector<128x128xf32>, vector<1x128xf32> -> vector<1x128xf32>
    %cst_27 = arith.constant 9.765625E-4 : f32
    %59 = vector.broadcast %cst_27 : f32 to vector<1x128xf32>
    %60 = arith.mulf %58, %59 : vector<1x128xf32>
    %cst_28 = arith.constant 9.99999974E-6 : f32
    %61 = vector.broadcast %cst_28 : f32 to vector<1x128xf32>
    %62 = arith.addf %60, %61 : vector<1x128xf32>
    %63 = math.rsqrt %62 : vector<1x128xf32>
    %64 = vector.shape_cast %63 : vector<1x128xf32> to vector<1x1x128xf32>
    %65 = vector.broadcast %64 : vector<1x1x128xf32> to vector<1x16x128xf32>
    %66 = arith.mulf %55, %65 : vector<1x16x128xf32>
    %67 = vector.shape_cast %22 : vector<1x128xf32> to vector<1x1x128xf32>
    %68 = vector.broadcast %67 : vector<1x1x128xf32> to vector<1x16x128xf32>
    %69 = arith.mulf %66, %68 : vector<1x16x128xf32>
    %70 = vector.shape_cast %23 : vector<1x128xf32> to vector<1x1x128xf32>
    %71 = vector.broadcast %70 : vector<1x1x128xf32> to vector<1x16x128xf32>
    %72 = arith.addf %69, %71 : vector<1x16x128xf32>
    %cst_29 = arith.constant 0.000000e+00 : f32
    %73 = vector.broadcast %cst_29 : f32 to vector<1x16x128xf32>
    %74 = arith.maximumf %72, %73 : vector<1x16x128xf32>
    %75 = vector.shape_cast %74 : vector<1x16x128xf32> to vector<16x128xf32>
    %76 = vector.shape_cast %24 : vector<1x128xf32> to vector<1x128xf32>
    %77 = vector.broadcast %76 : vector<1x128xf32> to vector<16x128xf32>
    %c0_30 = arith.constant 0 : index
    %c0_31 = arith.constant 0 : index
    %78 = vector.load %arg3[%c0_30, %c0_31] : memref<128x384xf32, #tpu.memory_space<vmem>>, vector<128x128xf32>
    %cst_32 = arith.constant dense<0.000000e+00> : vector<16x128xf32>
    %79 = tpu.matmul %75, %78, %cst_32 {dimension_numbers = #tpu.dot_dimension_numbers<[1], [0], [0], [1], [0, 0, 1, 1], [], []>} : vector<16x128xf32>, vector<128x128xf32>, vector<16x128xf32> -> vector<16x128xf32>
    %c1_i32_33 = arith.constant 1 : i32
    %80 = tpu.dynamic_rotate %79 by %c1_i32_33 dim 0 : vector<16x128xf32>, i32 -> vector<16x128xf32>
    %cst_34 = arith.constant 0.000000e+00 : f32
    %81 = vector.shape_cast %18 : vector<16x1xi1> to vector<16x1xi1>
    %82 = vector.broadcast %81 : vector<16x1xi1> to vector<16x128xi1>
    %83 = vector.broadcast %cst_34 : f32 to vector<16x128xf32>
    %84 = arith.select %82, %80, %83 : vector<16x128xi1>, vector<16x128xf32>
    %85 = arith.addf %77, %84 : vector<16x128xf32>
    %c0_35 = arith.constant 0 : index
    %c128_36 = arith.constant 128 : index
    %86 = vector.load %arg3[%c0_35, %c128_36] : memref<128x384xf32, #tpu.memory_space<vmem>>, vector<128x128xf32>
    %cst_37 = arith.constant dense<0.000000e+00> : vector<16x128xf32>
    %87 = tpu.matmul %75, %86, %cst_37 {dimension_numbers = #tpu.dot_dimension_numbers<[1], [0], [0], [1], [0, 0, 1, 1], [], []>} : vector<16x128xf32>, vector<128x128xf32>, vector<16x128xf32> -> vector<16x128xf32>
    %88 = arith.addf %85, %87 : vector<16x128xf32>
    %c0_38 = arith.constant 0 : index
    %c256_39 = arith.constant 256 : index
    %89 = vector.load %arg3[%c0_38, %c256_39] : memref<128x384xf32, #tpu.memory_space<vmem>>, vector<128x128xf32>
    %cst_40 = arith.constant dense<0.000000e+00> : vector<16x128xf32>
    %90 = tpu.matmul %75, %89, %cst_40 {dimension_numbers = #tpu.dot_dimension_numbers<[1], [0], [0], [1], [0, 0, 1, 1], [], []>} : vector<16x128xf32>, vector<128x128xf32>, vector<16x128xf32> -> vector<16x128xf32>
    %c15_i32_41 = arith.constant 15 : i32
    %91 = tpu.dynamic_rotate %90 by %c15_i32_41 dim 0 : vector<16x128xf32>, i32 -> vector<16x128xf32>
    %cst_42 = arith.constant 0.000000e+00 : f32
    %92 = vector.shape_cast %20 : vector<16x1xi1> to vector<16x1xi1>
    %93 = vector.broadcast %92 : vector<16x1xi1> to vector<16x128xi1>
    %94 = vector.broadcast %cst_42 : f32 to vector<16x128xf32>
    %95 = arith.select %93, %91, %94 : vector<16x128xi1>, vector<16x128xf32>
    %96 = arith.addf %88, %95 : vector<16x128xf32>
    %cst_43 = arith.constant 0.000000e+00 : f32
    %97 = vector.broadcast %cst_43 : f32 to vector<16x128xf32>
    %98 = arith.maximumf %96, %97 : vector<16x128xf32>
    %c0_44 = arith.constant 0 : index
    %c0_45 = arith.constant 0 : index
    %99 = vector.load %arg6[%c0_44, %c0_45] : memref<16x128xf32, #tpu.memory_space<vmem>>, vector<16x128xf32>
    tpu.vector_store %arg6[%c0_44, %c0_45], %98 {strides = array<i32>} : memref<16x128xf32, #tpu.memory_space<vmem>>, vector<16x128xf32>,
    return
  }
  func.func @transform_0(%arg0: i32) -> (i32, i32) {
    %c0_i32 = arith.constant 0 : i32
    %c0_i32_0 = arith.constant 0 : i32
    return %arg0, %c0_i32 : i32, i32
  }
  func.func @transform_1(%arg0: i32) -> (i32, i32) {
    %c0_i32 = arith.constant 0 : i32
    %c0_i32_0 = arith.constant 0 : i32
    %c0_i32_1 = arith.constant 0 : i32
    return %c0_i32, %c0_i32_0 : i32, i32
  }
  func.func @transform_2(%arg0: i32) -> (i32, i32) {
    %c0_i32 = arith.constant 0 : i32
    %c0_i32_0 = arith.constant 0 : i32
    %c0_i32_1 = arith.constant 0 : i32
    return %c0_i32, %c0_i32_0 : i32, i32
  }
  func.func @transform_3(%arg0: i32) -> (i32, i32) {
    %c0_i32 = arith.constant 0 : i32
    %c0_i32_0 = arith.constant 0 : i32
    %c0_i32_1 = arith.constant 0 : i32
    return %c0_i32, %c0_i32_0 : i32, i32
  }
  func.func @transform_4(%arg0: i32) -> (i32, i32) {
    %c0_i32 = arith.constant 0 : i32
    %c0_i32_0 = arith.constant 0 : i32
    %c0_i32_1 = arith.constant 0 : i32
    return %c0_i32, %c0_i32_0 : i32, i32
  }
  func.func @transform_5(%arg0: i32) -> (i32, i32) {
    %c0_i32 = arith.constant 0 : i32
    %c0_i32_0 = arith.constant 0 : i32
    return %arg0, %c0_i32 : i32, i32
  }
}

</mosaic_0001>

<llo_original>
// kernel: tpu_custom_call.1
$region0: #{tpu_custom_call.1}
  #allocation0 [shape = 'u32[]', space=smem, size = 0x4, offset = 0x4, fixed_abs, tag = 'smem constant byte address 0x4 - core index']
  #allocation1 [shape = 'u32[144,128]{1,0:T(1,128)}', space=vmem, size = 0x12000, scoped, tag = 'internal scratch']
  %s0 = inlined_call_operand.hbm [shape: f32[32,64], index: 0, kind: input, shape index: {}]
  %s1 = inlined_call_operand.hbm [shape: f32[64,384], index: 1, kind: input, shape index: {}]
  %s2 = inlined_call_operand.hbm [shape: f32[128,384], index: 2, kind: input, shape index: {}]
  %s3 = inlined_call_operand.vmem [shape: f32[4,128], index: 3, kind: input, shape index: {}]
  %s4 = inlined_call_operand.hbm [shape: f32[128,128], index: 4, kind: input, shape index: {}]
  %s5 = inlined_call_operand.hbm [shape: f32[32,128], index: 5, kind: output, shape index: {}]
  %s6 = sld [smem:[#allocation0]]
  $region69: #{tpu_custom_call.1} parent=0
    _
  %s8 = ssub.s32 1, %s6
  %s9 = scalar_select 0, %s8, %s6
  $region1: #{tpu_custom_call.1} parent=0
    #allocation2 [shape = 'u8[16384]{0}', space=vmem, size = 0x4000, scoped, tag = 'input window, operand 0']
    #allocation3 [shape = 's32[2]{0}', space=sflag, size = 0x8, scoped, tag = 'scoped memory for tpu_custom_call.1']
    #allocation4 [shape = 's32[2]{0}', space=sflag, size = 0x8, scoped, tag = 'scoped memory for tpu_custom_call.1']
    #allocation5 [shape = 'u8[98304]{0}', space=vmem, size = 0x18000, scoped, tag = 'input window, operand 1, single buffered']
    #allocation6 [shape = 's32[1]{0}', space=sflag, size = 0x4, scoped, tag = 'scoped memory for tpu_custom_call.1']
    #allocation7 [shape = 'u8[196608]{0}', space=vmem, size = 0x30000, scoped, tag = 'input window, operand 2, single buffered']
    #allocation8 [shape = 'u8[65536]{0}', space=vmem, size = 0x10000, scoped, tag = 'input window, operand 4, single buffered']
    #allocation9 [shape = 's32[1]{0}', space=sflag, size = 0x4, scoped, tag = 'scoped memory for tpu_custom_call.1']
    #allocation10 [shape = 'u8[16384]{0}', space=vmem, size = 0x4000, scoped, tag = 'output window, operand 0']
    %10 = vsyncpa [#allocation3], 0
    %s11 = scalar_lea.sflag [#allocation3], 1
    %12 = vsyncpa %s11, 0
    %13 = vsyncpa [#allocation6], 0
    %14 = vsyncpa [#allocation9], 0
    %15 = vsyncpa [#allocation4], 0
    %s16 = scalar_lea.sflag [#allocation4], 1
    %17 = vsyncpa %s16, 0
    loop: start=0, step=1, limit=4
    $region2: #{tpu_custom_call.1} parent=1 // loop_pre_header
      _
    $region3: #{tpu_custom_call.1} parent=1 // loop_header
      %s19 = sphi 0, %s23
      %p20 = scmp.ge.s32.totalorder %s19, 4
      %s29 = sphi 0, %s31
      %s32 = sphi 0, %s29
      %s33 = sphi 0, %s32
      %s49 = sphi 0, %s33
      %s53 = sphi 0, %s53
      %s55 = sphi 0, %s53
      %s56 = sphi 0, %s55
      %s70 = sphi 0, %s56
      %s74 = sphi 0, %s74
      %s76 = sphi 0, %s74
      %s77 = sphi 0, %s76
      %s91 = sphi 0, %s77
      %s95 = sphi 0, %s95
      %s97 = sphi 0, %s95
      %s98 = sphi 0, %s97
      %s112 = sphi 0, %s98
      %s116 = sphi 0, %s116
      %s118 = sphi 0, %s116
      %s119 = sphi 0, %s118
      %s133 = sphi 0, %s119
      %s139 = sphi 0, %s141
      %s142 = sphi 0, %s139
      %s143 = sphi 0, %s142
      %s159 = sphi 0, %s143
    $region4: #{tpu_custom_call.1} parent=1 // loop_header_branch
      %22 = sbr.rel (%p20) target = $region8
    $region5: #{tpu_custom_call.1} parent=1 // loop_body
      %s24 = ssub.s32 %s19, 1
      %s25 = ssub.s32 %s19, 2
      %s26 = sadd.s32 %s19, 1
      %s27 = ssub.s32 %s19, %s26
      %p28 = scmp.eq.s32.totalorder %s27, 0
      %s30 = sadd.s32 %s29, 1
      %s31 = scalar_select %p28, %s29, %s30
      %p34 = pneg %p28
      %p35 = scmp.eq.s32.totalorder %s19, 1
      %p36 = por %p34, %p35
      %p37 = scmp.ne.s32.totalorder %s29, %s32
      %p38 = scmp.eq.s32.totalorder %s19, 0
      %p39 = por %p37, %p38
      %p40 = scmp.ne.s32.totalorder %s29, %s32
      %p41 = scmp.eq.s32.totalorder %s24, 1
      %p42 = por %p40, %p41
      %p43 = scmp.ne.s32.totalorder %s32, %s33
      %p44 = scmp.eq.s32.totalorder %s24, 0
      %p45 = por %p43, %p44
      %p46 = scmp.ne.s32.totalorder %s32, %s33
      %p47 = scmp.eq.s32.totalorder %s25, 1
      %p48 = por %p46, %p47
      %p50 = scmp.ne.s32.totalorder %s33, %s49
      %p51 = scmp.eq.s32.totalorder %s25, 0
      %p52 = por %p50, %p51
      %s54 = sadd.s32 %s53, 1
      %p57 = scmp.eq.s32.totalorder %s19, 1
      %p58 = scmp.ne.s32.totalorder %s53, %s55
      %p59 = scmp.eq.s32.totalorder %s19, 0
      %p60 = por %p58, %p59
      %p61 = scmp.ne.s32.totalorder %s53, %s55
      %p62 = scmp.eq.s32.totalorder %s24, 1
      %p63 = por %p61, %p62
      %p64 = scmp.ne.s32.totalorder %s55, %s56
      %p65 = scmp.eq.s32.totalorder %s24, 0
      %p66 = por %p64, %p65
      %p67 = scmp.ne.s32.totalorder %s55, %s56
      %p68 = scmp.eq.s32.totalorder %s25, 1
      %p69 = por %p67, %p68
      %p71 = scmp.ne.s32.totalorder %s56, %s70
      %p72 = scmp.eq.s32.totalorder %s25, 0
      %p73 = por %p71, %p72
      %s75 = sadd.s32 %s74, 1
      %p78 = scmp.eq.s32.totalorder %s19, 1
      %p79 = scmp.ne.s32.totalorder %s74, %s76
      %p80 = scmp.eq.s32.totalorder %s19, 0
      %p81 = por %p79, %p80
      %p82 = scmp.ne.s32.totalorder %s74, %s76
      %p83 = scmp.eq.s32.totalorder %s24, 1
      %p84 = por %p82, %p83
      %p85 = scmp.ne.s32.totalorder %s76, %s77
      %p86 = scmp.eq.s32.totalorder %s24, 0
      %p87 = por %p85, %p86
      %p88 = scmp.ne.s32.totalorder %s76, %s77
      %p89 = scmp.eq.s32.totalorder %s25, 1
      %p90 = por %p88, %p89
      %p92 = scmp.ne.s32.totalorder %s77, %s91
      %p93 = scmp.eq.s32.totalorder %s25, 0
      %p94 = por %p92, %p93
      %s96 = sadd.s32 %s95, 1
      %p99 = scmp.eq.s32.totalorder %s19, 1
      %p100 = scmp.ne.s32.totalorder %s95, %s97
      %p101 = scmp.eq.s32.totalorder %s19, 0
      %p102 = por %p100, %p101
      %p103 = scmp.ne.s32.totalorder %s95, %s97
      %p104 = scmp.eq.s32.totalorder %s24, 1
      %p105 = por %p103, %p104
      %p106 = scmp.ne.s32.totalorder %s97, %s98
      %p107 = scmp.eq.s32.totalorder %s24, 0
      %p108 = por %p106, %p107
      %p109 = scmp.ne.s32.totalorder %s97, %s98
      %p110 = scmp.eq.s32.totalorder %s25, 1
      %p111 = por %p109, %p110
      %p113 = scmp.ne.s32.totalorder %s98, %s112
      %p114 = scmp.eq.s32.totalorder %s25, 0
      %p115 = por %p113, %p114
      %s117 = sadd.s32 %s116, 1
      %p120 = scmp.eq.s32.totalorder %s19, 1
      %p121 = scmp.ne.s32.totalorder %s116, %s118
      %p122 = scmp.eq.s32.totalorder %s19, 0
      %p123 = por %p121, %p122
      %p124 = scmp.ne.s32.totalorder %s116, %s118
      %p125 = scmp.eq.s32.totalorder %s24, 1
      %p126 = por %p124, %p125
      %p127 = scmp.ne.s32.totalorder %s118, %s119
      %p128 = scmp.eq.s32.totalorder %s24, 0
      %p129 = por %p127, %p128
      %p130 = scmp.ne.s32.totalorder %s118, %s119
      %p131 = scmp.eq.s32.totalorder %s25, 1
      %p132 = por %p130, %p131
      %p134 = scmp.ne.s32.totalorder %s119, %s133
      %p135 = scmp.eq.s32.totalorder %s25, 0
      %p136 = por %p134, %p135
      %s137 = ssub.s32 %s19, %s26
      %p138 = scmp.eq.s32.totalorder %s137, 0
      %s140 = sadd.s32 %s139, 1
      %s141 = scalar_select %p138, %s139, %s140
      %p144 = pneg %p138
      %p145 = scmp.eq.s32.totalorder %s19, 1
      %p146 = por %p144, %p145
      %p147 = scmp.ne.s32.totalorder %s139, %s142
      %p148 = scmp.eq.s32.totalorder %s19, 0
      %p149 = por %p147, %p148
      %p150 = scmp.ne.s32.totalorder %s139, %s142
      %p151 = scmp.eq.s32.totalorder %s24, 1
      %p152 = por %p150, %p151
      %p153 = scmp.ne.s32.totalorder %s142, %s143
      %p154 = scmp.eq.s32.totalorder %s24, 0
      %p155 = por %p153, %p154
      %p156 = scmp.ne.s32.totalorder %s142, %s143
      %p157 = scmp.eq.s32.totalorder %s25, 1
      %p158 = por %p156, %p157
      %p160 = scmp.ne.s32.totalorder %s143, %s159
      %p161 = scmp.eq.s32.totalorder %s25, 0
      %p162 = por %p160, %p161
      %p163 = scmp.le.s32.totalorder 1, %s19
      %p164 = scmp.lt.s32.totalorder %s19, 3
      %p165 = pnand %p163, %p164
      %p166 = pneg %p165
      // Predicated region
      $region9: #{tpu_custom_call.1} parent=5 // pred_check
        _
      $region10: #{tpu_custom_call.1} parent=5 // pred_check_branch
        %168 = sbr.rel (%p165) target = $region12
      $region11: #{tpu_custom_call.1} parent=5 // pred_region
        %s169 = ssub.s32 %s19, 1
        // Predicated region
        $region13: #{tpu_custom_call.1} parent=11 // pred_check
          %p170 = pneg %p66
        $region14: #{tpu_custom_call.1} parent=11 // pred_check_branch
          %172 = sbr.rel (%p170) target = $region16
        $region15: #{tpu_custom_call.1} parent=11 // pred_region
          %s174 = ssub.s32 3072, 3072
          %175 = vsyncadd [#allocation6], %s174
          %s176 = sshll.u32 [#allocation5], 4
          %s177 = int_to_ptr.vmem [resolvable:$true] %s176
          %182 = dma.hbm_to_vmem [thread:$0]  %s1, 3072, %s177, [#allocation6], 384, 384, 24
        $region16: #{tpu_custom_call.1} parent=11 // pred_fallthru
          _
        // Predicated region
        $region17: #{tpu_custom_call.1} parent=11 // pred_check
          %p183 = pneg %p87
        $region18: #{tpu_custom_call.1} parent=11 // pred_check_branch
          %185 = sbr.rel (%p183) target = $region20
        $region19: #{tpu_custom_call.1} parent=11 // pred_region
          %s187 = ssub.s32 6144, 6144
          %188 = vsyncadd [#allocation6], %s187
          %s189 = sshll.u32 [#allocation7], 4
          %s190 = int_to_ptr.vmem [resolvable:$true] %s189
          %195 = dma.hbm_to_vmem [thread:$0]  %s2, 6144, %s190, [#allocation6], 384, 384, 24
        $region20: #{tpu_custom_call.1} parent=11 // pred_fallthru
          _
        // Predicated region
        $region21: #{tpu_custom_call.1} parent=11 // pred_check
          %p196 = pneg %p108
        $region22: #{tpu_custom_call.1} parent=11 // pred_check_branch
          %198 = sbr.rel (%p196) target = $region24
        $region23: #{tpu_custom_call.1} parent=11 // pred_region
          _
        $region24: #{tpu_custom_call.1} parent=11 // pred_fallthru
          _
        // Predicated region
        $region25: #{tpu_custom_call.1} parent=11 // pred_check
          %p199 = pneg %p129
        $region26: #{tpu_custom_call.1} parent=11 // pred_check_branch
          %201 = sbr.rel (%p199) target = $region28
        $region27: #{tpu_custom_call.1} parent=11 // pred_region
          %s203 = ssub.s32 2048, 2048
          %204 = vsyncadd [#allocation9], %s203
          %s205 = sshll.u32 [#allocation8], 4
          %s206 = int_to_ptr.vmem [resolvable:$true] %s205
          %211 = dma.hbm_to_vmem [thread:$0]  %s4, 2048, %s206, [#allocation9], 128, 128, 8
        $region28: #{tpu_custom_call.1} parent=11 // pred_fallthru
          _
      $region12: #{tpu_custom_call.1} parent=5 // pred_fallthru
        _
      %p212 = scmp.lt.s32.totalorder %s19, 2
      // Predicated region
      $region29: #{tpu_custom_call.1} parent=5 // pred_check
        %p213 = pneg %p212
      $region30: #{tpu_custom_call.1} parent=5 // pred_check_branch
        %215 = sbr.rel (%p213) target = $region32
      $region31: #{tpu_custom_call.1} parent=5 // pred_region
        // Predicated region
        $region33: #{tpu_custom_call.1} parent=31 // pred_check
          %p216 = pneg %p39
        $region34: #{tpu_custom_call.1} parent=31 // pred_check_branch
          %218 = sbr.rel (%p216) target = $region36
        $region35: #{tpu_custom_call.1} parent=31 // pred_region
          %s219 = sand.u32 %s29, 1
          %s220 = scalar_lea.sflag [#allocation3], %s219
          %s221 = sand.u32 %s29, 1
          %s222 = smul.addr %s221, 16
          %s223 = scalar_lea.vmem [#allocation2], %s222
          %s224 = smul.u32 2, %s19
          %s226 = ssub.s32 256, 256
          %227 = vsyncadd %s220, %s226
          %s228 = smul.addr %s224, 128
          %s229 = scalar_lea.hbm %s0, %s228
          %s230 = sshll.u32 %s223, 4
          %s231 = int_to_ptr.vmem [resolvable:$true] %s230
          %236 = dma.hbm_to_vmem [thread:$0]  %s229, 256, %s231, %s220, 128, 128, 8
        $region36: #{tpu_custom_call.1} parent=31 // pred_fallthru
          _
      $region32: #{tpu_custom_call.1} parent=5 // pred_fallthru
        _
      %p237 = scmp.le.s32.totalorder 1, %s19
      %p238 = scmp.lt.s32.totalorder %s19, 3
      %p239 = pnand %p237, %p238
      %p240 = pneg %p239
      // Predicated region
      $region37: #{tpu_custom_call.1} parent=5 // pred_check
        _
      $region38: #{tpu_custom_call.1} parent=5 // pred_check_branch
        %242 = sbr.rel (%p239) target = $region40
      $region39: #{tpu_custom_call.1} parent=5 // pred_region
        %s243 = ssub.s32 %s19, 1
        %s244 = sand.u32 %s32, 1
        %s245 = scalar_lea.sflag [#allocation3], %s244
        %s246 = sand.u32 %s32, 1
        %s247 = smul.addr %s246, 16
        %s248 = scalar_lea.vmem [#allocation2], %s247
        // Predicated region
        $region41: #{tpu_custom_call.1} parent=39 // pred_check
          %p249 = pneg %p45
        $region42: #{tpu_custom_call.1} parent=39 // pred_check_branch
          %251 = sbr.rel (%p249) target = $region44
        $region43: #{tpu_custom_call.1} parent=39 // pred_region
          %252 = dma.done %s245, 256
        $region44: #{tpu_custom_call.1} parent=39 // pred_fallthru
          _
        // Predicated region
        $region45: #{tpu_custom_call.1} parent=39 // pred_check
          %p253 = pneg %p66
        $region46: #{tpu_custom_call.1} parent=39 // pred_check_branch
          %255 = sbr.rel (%p253) target = $region48
        $region47: #{tpu_custom_call.1} parent=39 // pred_region
          %256 = dma.done [#allocation6], 3072
        $region48: #{tpu_custom_call.1} parent=39 // pred_fallthru
          _
        // Predicated region
        $region49: #{tpu_custom_call.1} parent=39 // pred_check
          %p257 = pneg %p87
        $region50: #{tpu_custom_call.1} parent=39 // pred_check_branch
          %259 = sbr.rel (%p257) target = $region52
        $region51: #{tpu_custom_call.1} parent=39 // pred_region
          %260 = dma.done [#allocation6], 6144
        $region52: #{tpu_custom_call.1} parent=39 // pred_fallthru
          _
        // Predicated region
        $region53: #{tpu_custom_call.1} parent=39 // pred_check
          %p261 = pneg %p129
        $region54: #{tpu_custom_call.1} parent=39 // pred_check_branch
          %263 = sbr.rel (%p261) target = $region56
        $region55: #{tpu_custom_call.1} parent=39 // pred_region
          %264 = dma.done [#allocation9], 2048
        $region56: #{tpu_custom_call.1} parent=39 // pred_fallthru
          _
        %s265 = sand.u32 %s32, 1
        %s266 = scalar_lea.sflag [#allocation3], %s265
        %s267 = sand.u32 %s32, 1
        %s268 = smul.addr %s267, 16
        %s269 = scalar_lea.vmem [#allocation2], %s268
        %p270 = pneg %p45
        %p271 = pneg %p42
        %p272 = pneg %p66
        %p273 = pneg %p63
        %p274 = pneg %p87
        %p275 = pneg %p84
        %p276 = pneg %p108
        %p277 = pneg %p105
        %p278 = pneg %p129
        %p279 = pneg %p126
        %p280 = pneg %p155
        %p281 = pneg %p152
        %s282 = sand.u32 %s142, 1
        %s283 = scalar_lea.sflag [#allocation4], %s282
        %s284 = sand.u32 %s142, 1
        %s285 = smul.addr %s284, 16
        %s286 = scalar_lea.vmem [#allocation10], %s285
        %s287 = smul.u32 2, %s24
        %s288 = smul.u32 2, %s24
        %v289 = vlaneseq
        %v290 = vshrl.u32 %v289, 7
        %v291 = vadd.s32 %v290, 8
        %vm292 = vcmp.lt.s32.totalorder %v290, 0
        %v293 = vsub.s32 0, %v290
        %v294 = vsel %vm292, %v293, %v290
        %v295 = vshrl.u32 %v294, 4
        %v296 = vand.u32 %v294, 15
        %v297 = vsub.s32 0, %v296
        %v298 = vsel %vm292, %v297, %v296
        %vm299 = vcmp.lt.s32.totalorder %v291, 0
        %v300 = vsub.s32 0, %v291
        %v301 = vsel %vm299, %v300, %v291
        %v302 = vshrl.u32 %v301, 4
        %v303 = vand.u32 %v301, 15
        %v304 = vsub.s32 0, %v303
        %v305 = vsel %vm299, %v304, %v303
        %vm306 = vcmp.ne.s32.totalorder %v298, 0
        %vm307 = vcmp.ne.s32.totalorder %v305, 0
        %vm308 = vcmp.lt.s32.totalorder %v298, 0
        %vm309 = vcmp.lt.s32.totalorder %v305, 0
        %vm310 = vmand %vm308, %vm306
        %vm311 = vmand %vm309, %vm307
        %v312 = vadd.s32 %v298, 16
        %v313 = vadd.s32 %v305, 16
        %v314 = vsel %vm310, %v312, %v298
        %v315 = vsel %vm311, %v313, %v305
        %vm316 = vcmp.ge.s32.totalorder %v314, 1
        %vm317 = vcmp.ge.s32.totalorder %v315, 1
        %vm318 = vcmp.lt.s32.totalorder %v314, 15
        %vm319 = vcmp.lt.s32.totalorder %v315, 15
        %v320 = vld [vmem:[%s3] sm:$0x1]
        %v321 = vld [vmem:[%s3 + $0x1] sm:$0x1]
        %v322 = vld [vmem:[%s3 + $0x2] sm:$0x1]
        %v323 = vld [vmem:[%s3 + $0x3] sm:$0x1]
        %v324 = vld [vmem:[%s248] sm:$0xff]
        %v325 = vld [vmem:[%s248 + $0x8] sm:$0xff]
        %v326 = vlaneseq
        %v327 = vshrl.u32 %v326, 7
        %v328 = vsub.s32 0, %v327
        %v329 = vrot.slane %v320, %v328
        %v330 = vld [vmem:[#allocation5] sm:$0xff]
        %v331 = vld [vmem:[#allocation5 + $0x18] sm:$0xff]
        %v332 = vld [vmem:[#allocation5 + $0x30] sm:$0xff]
        %v333 = vld [vmem:[#allocation5 + $0x48] sm:$0xff]
        %v334 = vld [vmem:[#allocation5 + $0x60] sm:$0xff]
        %v335 = vld [vmem:[#allocation5 + $0x78] sm:$0xff]
        %v336 = vld [vmem:[#allocation5 + $0x90] sm:$0xff]
        %v337 = vld [vmem:[#allocation5 + $0xa8] sm:$0xff]
        %vm338 = vcmask 523264
        %v340 = vsel %vm338, %v324, 0
        %v343 = vsel %vm338, %v325, 0
        %345 = vmatprep.subr.mxu0 0.0
        %346 = vmatpush1.msra.mxu0 0.0
        %347 = vmatprep.subr.mxu0 0.0
        %348 = vmatpush1.msra.mxu0 0.0
        %349 = vmatprep.subr.mxu0 0.0
        %350 = vmatpush1.msra.mxu0 0.0
        %351 = vmatprep.subr.mxu0 0.0
        %352 = vmatpush1.msra.mxu0 0.0
        %353 = vmatprep.subr.mxu0 0.0
        %354 = vmatpush1.msra.mxu0 0.0
        %355 = vmatprep.subr.mxu0 0.0
        %356 = vmatpush1.msra.mxu0 0.0
        %357 = vmatprep.subr.mxu0 0.0
        %358 = vmatpush1.msra.mxu0 0.0
        %359 = vmatprep.subr.mxu0 0.0
        %360 = vmatpush1.msra.mxu0 0.0
        %361 = vmatprep.subr.mxu0 0.0
        %362 = vmatpush1.msra.mxu0 %v337
        %363 = vmatprep.subr.mxu0 0.0
        %364 = vmatpush1.msra.mxu0 %v336
        %365 = vmatprep.subr.mxu0 0.0
        %366 = vmatpush1.msra.mxu0 %v335
        %367 = vmatprep.subr.mxu0 0.0
        %368 = vmatpush1.msra.mxu0 %v334
        %369 = vmatprep.subr.mxu0 0.0
        %370 = vmatpush1.msra.mxu0 %v333
        %371 = vmatprep.subr.mxu0 0.0
        %372 = vmatpush1.msra.mxu0 %v332
        %373 = vmatprep.subr.mxu0 0.0
        %374 = vmatpush1.msra.mxu0 %v331
        %375 = vmatprep.subr.mxu0 0.0
        %376 = vmatpush1.msra.mxu0 %v330
        %377 = vmatprep.subr.mxu0 0.0
        %378 = vmatpush2.msra.mxu0 0.0
        %379 = vmatprep.subr.mxu0 0.0
        %380 = vmatpush2.msra.mxu0 0.0
        %381 = vmatprep.subr.mxu0 0.0
        %382 = vmatpush2.msra.mxu0 0.0
        %383 = vmatprep.subr.mxu0 0.0
        %384 = vmatpush2.msra.mxu0 0.0
        %385 = vmatprep.subr.mxu0 0.0
        %386 = vmatpush2.msra.mxu0 0.0
        %387 = vmatprep.subr.mxu0 0.0
        %388 = vmatpush2.msra.mxu0 0.0
        %389 = vmatprep.subr.mxu0 0.0
        %390 = vmatpush2.msra.mxu0 0.0
        %391 = vmatprep.subr.mxu0 0.0
        %392 = vmatpush2.msra.mxu0 0.0
        %393 = vmatprep.subr.mxu0 0.0
        %394 = vmatpush2.msra.mxu0 0.0
        %395 = vmatprep.subr.mxu0 0.0
        %396 = vmatpush2.msra.mxu0 0.0
        %397 = vmatprep.subr.mxu0 0.0
        %398 = vmatpush2.msra.mxu0 0.0
        %399 = vmatprep.subr.mxu0 0.0
        %400 = vmatpush2.msra.mxu0 0.0
        %401 = vmatprep.subr.mxu0 0.0
        %402 = vmatpush2.msra.mxu0 0.0
        %403 = vmatprep.subr.mxu0 0.0
        %404 = vmatpush2.msra.mxu0 0.0
        %405 = vmatprep.subr.mxu0 0.0
        %406 = vmatpush2.msra.mxu0 0.0
        %407 = vmatprep.subr.mxu0 0.0
        %408 = vmatpush2.msra.mxu0 0.0
        %409 = vmatprep.mubr.f32.mxu0 0.0
        %410 = vmatmul.mubr.f32.gmra.mxu0 %v340
        %v411 = vpop.f32.mrf.mxu0
        %v412 = vadd.f32 0.0, %v411
        %v413 = vpop.f32.mrf.mxu0
        %414 = vmatprep.mubr.f32.mxu0 0.0
        %415 = vmatmul.mubr.f32.gmra.mxu0 %v343
        %v416 = vpop.f32.mrf.mxu0
        %v417 = vadd.f32 0.0, %v416
        %v418 = vpop.f32.mrf.mxu0
        %419 = vdwg.mxu0
        %v420 = vrot.slane %v412, 7
        %v421 = vrot.slane %v417, 7
        %vm422 = vcmp.lt.s32.totalorder %v290, 1
        %v423 = vsel %vm422, %v420, %v421
        %v424 = vsel %vm422, %v421, %v420
        %v425 = vsel %vm316, 1, 0
        %v426 = vsel %vm317, 1, 0
        %vm427 = vcmp.eq.s32.totalorder %v425, 1
        %vm428 = vcmp.eq.s32.totalorder %v426, 1
        %v429 = vsel %vm427, %v424, 0.0
        %v430 = vsel %vm428, %v423, 0.0
        %v431 = vadd.f32 %v329, %v429
        %v432 = vadd.f32 %v329, %v430
        %v433 = vld [vmem:[#allocation5 + $0x8] sm:$0xff]
        %v434 = vld [vmem:[#allocation5 + $0x20] sm:$0xff]
        %v435 = vld [vmem:[#allocation5 + $0x38] sm:$0xff]
        %v436 = vld [vmem:[#allocation5 + $0x50] sm:$0xff]
        %v437 = vld [vmem:[#allocation5 + $0x68] sm:$0xff]
        %v438 = vld [vmem:[#allocation5 + $0x80] sm:$0xff]
        %v439 = vld [vmem:[#allocation5 + $0x98] sm:$0xff]
        %v440 = vld [vmem:[#allocation5 + $0xb0] sm:$0xff]
        %441 = vmatprep.subr.mxu0 0.0
        %442 = vmatpush1.msra.mxu0 0.0
        %443 = vmatprep.subr.mxu0 0.0
        %444 = vmatpush1.msra.mxu0 0.0
        %445 = vmatprep.subr.mxu0 0.0
        %446 = vmatpush1.msra.mxu0 0.0
        %447 = vmatprep.subr.mxu0 0.0
        %448 = vmatpush1.msra.mxu0 0.0
        %449 = vmatprep.subr.mxu0 0.0
        %450 = vmatpush1.msra.mxu0 0.0
        %451 = vmatprep.subr.mxu0 0.0
        %452 = vmatpush1.msra.mxu0 0.0
        %453 = vmatprep.subr.mxu0 0.0
        %454 = vmatpush1.msra.mxu0 0.0
        %455 = vmatprep.subr.mxu0 0.0
        %456 = vmatpush1.msra.mxu0 0.0
        %457 = vmatprep.subr.mxu0 0.0
        %458 = vmatpush1.msra.mxu0 %v440
        %459 = vmatprep.subr.mxu0 0.0
        %460 = vmatpush1.msra.mxu0 %v439
        %461 = vmatprep.subr.mxu0 0.0
        %462 = vmatpush1.msra.mxu0 %v438
        %463 = vmatprep.subr.mxu0 0.0
        %464 = vmatpush1.msra.mxu0 %v437
        %465 = vmatprep.subr.mxu0 0.0
        %466 = vmatpush1.msra.mxu0 %v436
        %467 = vmatprep.subr.mxu0 0.0
        %468 = vmatpush1.msra.mxu0 %v435
        %469 = vmatprep.subr.mxu0 0.0
        %470 = vmatpush1.msra.mxu0 %v434
        %471 = vmatprep.subr.mxu0 0.0
        %472 = vmatpush1.msra.mxu0 %v433
        %473 = vmatprep.subr.mxu0 0.0
        %474 = vmatpush2.msra.mxu0 0.0
        %475 = vmatprep.subr.mxu0 0.0
        %476 = vmatpush2.msra.mxu0 0.0
        %477 = vmatprep.subr.mxu0 0.0
        %478 = vmatpush2.msra.mxu0 0.0
        %479 = vmatprep.subr.mxu0 0.0
        %480 = vmatpush2.msra.mxu0 0.0
        %481 = vmatprep.subr.mxu0 0.0
        %482 = vmatpush2.msra.mxu0 0.0
        %483 = vmatprep.subr.mxu0 0.0
        %484 = vmatpush2.msra.mxu0 0.0
        %485 = vmatprep.subr.mxu0 0.0
        %486 = vmatpush2.msra.mxu0 0.0
        %487 = vmatprep.subr.mxu0 0.0
        %488 = vmatpush2.msra.mxu0 0.0
        %489 = vmatprep.subr.mxu0 0.0
        %490 = vmatpush2.msra.mxu0 0.0
        %491 = vmatprep.subr.mxu0 0.0
        %492 = vmatpush2.msra.mxu0 0.0
        %493 = vmatprep.subr.mxu0 0.0
        %494 = vmatpush2.msra.mxu0 0.0
        %495 = vmatprep.subr.mxu0 0.0
        %496 = vmatpush2.msra.mxu0 0.0
        %497 = vmatprep.subr.mxu0 0.0
        %498 = vmatpush2.msra.mxu0 0.0
        %499 = vmatprep.subr.mxu0 0.0
        %500 = vmatpush2.msra.mxu0 0.0
        %501 = vmatprep.subr.mxu0 0.0
        %502 = vmatpush2.msra.mxu0 0.0
        %503 = vmatprep.subr.mxu0 0.0
        %504 = vmatpush2.msra.mxu0 0.0
        %505 = vmatprep.mubr.f32.mxu0 0.0
        %506 = vmatmul.mubr.f32.gmra.mxu0 %v340
        %v507 = vpop.f32.mrf.mxu0
        %v508 = vadd.f32 0.0, %v507
        %v509 = vpop.f32.mrf.mxu0
        %510 = vmatprep.mubr.f32.mxu0 0.0
        %511 = vmatmul.mubr.f32.gmra.mxu0 %v343
        %v512 = vpop.f32.mrf.mxu0
        %v513 = vadd.f32 0.0, %v512
        %v514 = vpop.f32.mrf.mxu0
        %515 = vdwg.mxu0
        %v516 = vadd.f32 %v431, %v508
        %v517 = vadd.f32 %v432, %v513
        %v518 = vld [vmem:[#allocation5 + $0x10] sm:$0xff]
        %v519 = vld [vmem:[#allocation5 + $0x28] sm:$0xff]
        %v520 = vld [vmem:[#allocation5 + $0x40] sm:$0xff]
        %v521 = vld [vmem:[#allocation5 + $0x58] sm:$0xff]
        %v522 = vld [vmem:[#allocation5 + $0x70] sm:$0xff]
        %v523 = vld [vmem:[#allocation5 + $0x88] sm:$0xff]
        %v524 = vld [vmem:[#allocation5 + $0xa0] sm:$0xff]
        %v525 = vld [vmem:[#allocation5 + $0xb8] sm:$0xff]
        %526 = vmatprep.subr.mxu0 0.0
        %527 = vmatpush1.msra.mxu0 0.0
        %528 = vmatprep.subr.mxu0 0.0
        %529 = vmatpush1.msra.mxu0 0.0
        %530 = vmatprep.subr.mxu0 0.0
        %531 = vmatpush1.msra.mxu0 0.0
        %532 = vmatprep.subr.mxu0 0.0
        %533 = vmatpush1.msra.mxu0 0.0
        %534 = vmatprep.subr.mxu0 0.0
        %535 = vmatpush1.msra.mxu0 0.0
        %536 = vmatprep.subr.mxu0 0.0
        %537 = vmatpush1.msra.mxu0 0.0
        %538 = vmatprep.subr.mxu0 0.0
        %539 = vmatpush1.msra.mxu0 0.0
        %540 = vmatprep.subr.mxu0 0.0
        %541 = vmatpush1.msra.mxu0 0.0
        %542 = vmatprep.subr.mxu0 0.0
        %543 = vmatpush1.msra.mxu0 %v525
        %544 = vmatprep.subr.mxu0 0.0
        %545 = vmatpush1.msra.mxu0 %v524
        %546 = vmatprep.subr.mxu0 0.0
        %547 = vmatpush1.msra.mxu0 %v523
        %548 = vmatprep.subr.mxu0 0.0
        %549 = vmatpush1.msra.mxu0 %v522
        %550 = vmatprep.subr.mxu0 0.0
        %551 = vmatpush1.msra.mxu0 %v521
        %552 = vmatprep.subr.mxu0 0.0
        %553 = vmatpush1.msra.mxu0 %v520
        %554 = vmatprep.subr.mxu0 0.0
        %555 = vmatpush1.msra.mxu0 %v519
        %556 = vmatprep.subr.mxu0 0.0
        %557 = vmatpush1.msra.mxu0 %v518
        %558 = vmatprep.subr.mxu0 0.0
        %559 = vmatpush2.msra.mxu0 0.0
        %560 = vmatprep.subr.mxu0 0.0
        %561 = vmatpush2.msra.mxu0 0.0
        %562 = vmatprep.subr.mxu0 0.0
        %563 = vmatpush2.msra.mxu0 0.0
        %564 = vmatprep.subr.mxu0 0.0
        %565 = vmatpush2.msra.mxu0 0.0
        %566 = vmatprep.subr.mxu0 0.0
        %567 = vmatpush2.msra.mxu0 0.0
        %568 = vmatprep.subr.mxu0 0.0
        %569 = vmatpush2.msra.mxu0 0.0
        %570 = vmatprep.subr.mxu0 0.0
        %571 = vmatpush2.msra.mxu0 0.0
        %572 = vmatprep.subr.mxu0 0.0
        %573 = vmatpush2.msra.mxu0 0.0
        %574 = vmatprep.subr.mxu0 0.0
        %575 = vmatpush2.msra.mxu0 0.0
        %576 = vmatprep.subr.mxu0 0.0
        %577 = vmatpush2.msra.mxu0 0.0
        %578 = vmatprep.subr.mxu0 0.0
        %579 = vmatpush2.msra.mxu0 0.0
        %580 = vmatprep.subr.mxu0 0.0
        %581 = vmatpush2.msra.mxu0 0.0
        %582 = vmatprep.subr.mxu0 0.0
        %583 = vmatpush2.msra.mxu0 0.0
        %584 = vmatprep.subr.mxu0 0.0
        %585 = vmatpush2.msra.mxu0 0.0
        %586 = vmatprep.subr.mxu0 0.0
        %587 = vmatpush2.msra.mxu0 0.0
        %588 = vmatprep.subr.mxu0 0.0
        %589 = vmatpush2.msra.mxu0 0.0
        %590 = vmatprep.mubr.f32.mxu0 0.0
        %591 = vmatmul.mubr.f32.gmra.mxu0 %v340
        %v592 = vpop.f32.mrf.mxu0
        %v593 = vadd.f32 0.0, %v592
        %v594 = vpop.f32.mrf.mxu0
        %595 = vmatprep.mubr.f32.mxu0 0.0
        %596 = vmatmul.mubr.f32.gmra.mxu0 %v343
        %v597 = vpop.f32.mrf.mxu0
        %v598 = vadd.f32 0.0, %v597
        %v599 = vpop.f32.mrf.mxu0
        %600 = vdwg.mxu0
        %v601 = vrot.slane %v593, 1
        %v602 = vrot.slane %v598, 1
        %vm603 = vcmp.lt.s32.totalorder %v290, 7
        %v604 = vsel %vm603, %v601, %v602
        %v605 = vsel %vm603, %v602, %v601
        %v606 = vsel %vm318, 1, 0
        %v607 = vsel %vm319, 1, 0
        %vm608 = vcmp.eq.s32.totalorder %v606, 1
        %vm609 = vcmp.eq.s32.totalorder %v607, 1
        %v610 = vsel %vm608, %v604, 0.0
        %v611 = vsel %vm609, %v605, 0.0
        %v612 = vadd.f32 %v516, %v610
        %v613 = vadd.f32 %v517, %v611
        %v614 = vld [vmem:[#allocation8] sm:$0xff]
        %v615 = vld [vmem:[#allocation8 + $0x8] sm:$0xff]
        %v616 = vld [vmem:[#allocation8 + $0x10] sm:$0xff]
        %v617 = vld [vmem:[#allocation8 + $0x18] sm:$0xff]
        %v618 = vld [vmem:[#allocation8 + $0x20] sm:$0xff]
        %v619 = vld [vmem:[#allocation8 + $0x28] sm:$0xff]
        %v620 = vld [vmem:[#allocation8 + $0x30] sm:$0xff]
        %v621 = vld [vmem:[#allocation8 + $0x38] sm:$0xff]
        %v622 = vld [vmem:[#allocation8 + $0x40] sm:$0xff]
        %v623 = vld [vmem:[#allocation8 + $0x48] sm:$0xff]
        %v624 = vld [vmem:[#allocation8 + $0x50] sm:$0xff]
        %v625 = vld [vmem:[#allocation8 + $0x58] sm:$0xff]
        %v626 = vld [vmem:[#allocation8 + $0x60] sm:$0xff]
        %v627 = vld [vmem:[#allocation8 + $0x68] sm:$0xff]
        %v628 = vld [vmem:[#allocation8 + $0x70] sm:$0xff]
        %v629 = vld [vmem:[#allocation8 + $0x78] sm:$0xff]
        %v630 = vadd.f32 %v612, %v613
        %v631 = vrot.slane %v630, 4
        %v632 = vadd.f32 %v630, %v631
        %v633 = vrot.slane %v632, 2
        %v634 = vadd.f32 %v632, %v633
        %v635 = vrot.slane %v634, 1
        %v636 = vadd.f32 %v634, %v635
        %637 = vmatprep.subr.mxu0 0.0
        %638 = vmatpush1.msra.mxu0 %v629
        %639 = vmatprep.subr.mxu0 0.0
        %640 = vmatpush1.msra.mxu0 %v628
        %641 = vmatprep.subr.mxu0 0.0
        %642 = vmatpush1.msra.mxu0 %v627
        %643 = vmatprep.subr.mxu0 0.0
        %644 = vmatpush1.msra.mxu0 %v626
        %645 = vmatprep.subr.mxu0 0.0
        %646 = vmatpush1.msra.mxu0 %v625
        %647 = vmatprep.subr.mxu0 0.0
        %648 = vmatpush1.msra.mxu0 %v624
        %649 = vmatprep.subr.mxu0 0.0
        %650 = vmatpush1.msra.mxu0 %v623
        %651 = vmatprep.subr.mxu0 0.0
        %652 = vmatpush1.msra.mxu0 %v622
        %653 = vmatprep.subr.mxu0 0.0
        %654 = vmatpush1.msra.mxu0 %v621
        %655 = vmatprep.subr.mxu0 0.0
        %656 = vmatpush1.msra.mxu0 %v620
        %657 = vmatprep.subr.mxu0 0.0
        %658 = vmatpush1.msra.mxu0 %v619
        %659 = vmatprep.subr.mxu0 0.0
        %660 = vmatpush1.msra.mxu0 %v618
        %661 = vmatprep.subr.mxu0 0.0
        %662 = vmatpush1.msra.mxu0 %v617
        %663 = vmatprep.subr.mxu0 0.0
        %664 = vmatpush1.msra.mxu0 %v616
        %665 = vmatprep.subr.mxu0 0.0
        %666 = vmatpush1.msra.mxu0 %v615
        %667 = vmatprep.subr.mxu0 0.0
        %668 = vmatpush1.msra.mxu0 %v614
        %669 = vmatprep.subr.mxu0 0.0
        %670 = vmatpush2.msra.mxu0 0.0
        %671 = vmatprep.subr.mxu0 0.0
        %672 = vmatpush2.msra.mxu0 0.0
        %673 = vmatprep.subr.mxu0 0.0
        %674 = vmatpush2.msra.mxu0 0.0
        %675 = vmatprep.subr.mxu0 0.0
        %676 = vmatpush2.msra.mxu0 0.0
        %677 = vmatprep.subr.mxu0 0.0
        %678 = vmatpush2.msra.mxu0 0.0
        %679 = vmatprep.subr.mxu0 0.0
        %680 = vmatpush2.msra.mxu0 0.0
        %681 = vmatprep.subr.mxu0 0.0
        %682 = vmatpush2.msra.mxu0 0.0
        %683 = vmatprep.subr.mxu0 0.0
        %684 = vmatpush2.msra.mxu0 0.0
        %685 = vmatprep.subr.mxu0 0.0
        %686 = vmatpush2.msra.mxu0 0.0
        %687 = vmatprep.subr.mxu0 0.0
        %688 = vmatpush2.msra.mxu0 0.0
        %689 = vmatprep.subr.mxu0 0.0
        %690 = vmatpush2.msra.mxu0 0.0
        %691 = vmatprep.subr.mxu0 0.0
        %692 = vmatpush2.msra.mxu0 0.0
        %693 = vmatprep.subr.mxu0 0.0
        %694 = vmatpush2.msra.mxu0 0.0
        %695 = vmatprep.subr.mxu0 0.0
        %696 = vmatpush2.msra.mxu0 0.0
        %697 = vmatprep.subr.mxu0 0.0
        %698 = vmatpush2.msra.mxu0 0.0
        %699 = vmatprep.subr.mxu0 0.0
        %700 = vmatpush2.msra.mxu0 0.0
        %701 = vmatprep.mubr.f32.mxu0 0.0
        %702 = vmatmul.mubr.f32.gmra.mxu0 %v636
        %v703 = vpop.f32.mrf.mxu0
        %v704 = vadd.f32 0.0, %v703
        %v705 = vpop.f32.mrf.mxu0
        %706 = vdwg.mxu0
        %v707 = vmul.f32 %v704, 0.0009765625
        %v708 = vlaneseq
        %v709 = vshrl.u32 %v708, 7
        %v710 = vsub.s32 0, %v709
        %v711 = vrot.slane %v707, %v710
        %v712 = vsub.f32 %v612, %v711
        %v713 = vsub.f32 %v613, %v711
        %v714 = vmul.f32 %v712, %v712
        %v715 = vmul.f32 %v713, %v713
        %v716 = vadd.f32 %v714, %v715
        %v717 = vrot.slane %v716, 4
        %v718 = vadd.f32 %v716, %v717
        %v719 = vrot.slane %v718, 2
        %v720 = vadd.f32 %v718, %v719
        %v721 = vrot.slane %v720, 1
        %v722 = vadd.f32 %v720, %v721
        %723 = vmatprep.subr.mxu0 0.0
        %724 = vmatpush1.msra.mxu0 %v629
        %725 = vmatprep.subr.mxu0 0.0
        %726 = vmatpush1.msra.mxu0 %v628
        %727 = vmatprep.subr.mxu0 0.0
        %728 = vmatpush1.msra.mxu0 %v627
        %729 = vmatprep.subr.mxu0 0.0
        %730 = vmatpush1.msra.mxu0 %v626
        %731 = vmatprep.subr.mxu0 0.0
        %732 = vmatpush1.msra.mxu0 %v625
        %733 = vmatprep.subr.mxu0 0.0
        %734 = vmatpush1.msra.mxu0 %v624
        %735 = vmatprep.subr.mxu0 0.0
        %736 = vmatpush1.msra.mxu0 %v623
        %737 = vmatprep.subr.mxu0 0.0
        %738 = vmatpush1.msra.mxu0 %v622
        %739 = vmatprep.subr.mxu0 0.0
        %740 = vmatpush1.msra.mxu0 %v621
        %741 = vmatprep.subr.mxu0 0.0
        %742 = vmatpush1.msra.mxu0 %v620
        %743 = vmatprep.subr.mxu0 0.0
        %744 = vmatpush1.msra.mxu0 %v619
        %745 = vmatprep.subr.mxu0 0.0
        %746 = vmatpush1.msra.mxu0 %v618
        %747 = vmatprep.subr.mxu0 0.0
        %748 = vmatpush1.msra.mxu0 %v617
        %749 = vmatprep.subr.mxu0 0.0
        %750 = vmatpush1.msra.mxu0 %v616
        %751 = vmatprep.subr.mxu0 0.0
        %752 = vmatpush1.msra.mxu0 %v615
        %753 = vmatprep.subr.mxu0 0.0
        %754 = vmatpush1.msra.mxu0 %v614
        %755 = vmatprep.subr.mxu0 0.0
        %756 = vmatpush2.msra.mxu0 0.0
        %757 = vmatprep.subr.mxu0 0.0
        %758 = vmatpush2.msra.mxu0 0.0
        %759 = vmatprep.subr.mxu0 0.0
        %760 = vmatpush2.msra.mxu0 0.0
        %761 = vmatprep.subr.mxu0 0.0
        %762 = vmatpush2.msra.mxu0 0.0
        %763 = vmatprep.subr.mxu0 0.0
        %764 = vmatpush2.msra.mxu0 0.0
        %765 = vmatprep.subr.mxu0 0.0
        %766 = vmatpush2.msra.mxu0 0.0
        %767 = vmatprep.subr.mxu0 0.0
        %768 = vmatpush2.msra.mxu0 0.0
        %769 = vmatprep.subr.mxu0 0.0
        %770 = vmatpush2.msra.mxu0 0.0
        %771 = vmatprep.subr.mxu0 0.0
        %772 = vmatpush2.msra.mxu0 0.0
        %773 = vmatprep.subr.mxu0 0.0
        %774 = vmatpush2.msra.mxu0 0.0
        %775 = vmatprep.subr.mxu0 0.0
        %776 = vmatpush2.msra.mxu0 0.0
        %777 = vmatprep.subr.mxu0 0.0
        %778 = vmatpush2.msra.mxu0 0.0
        %779 = vmatprep.subr.mxu0 0.0
        %780 = vmatpush2.msra.mxu0 0.0
        %781 = vmatprep.subr.mxu0 0.0
        %782 = vmatpush2.msra.mxu0 0.0
        %783 = vmatprep.subr.mxu0 0.0
        %784 = vmatpush2.msra.mxu0 0.0
        %785 = vmatprep.subr.mxu0 0.0
        %786 = vmatpush2.msra.mxu0 0.0
        %787 = vmatprep.mubr.f32.mxu0 0.0
        %788 = vmatmul.mubr.f32.gmra.mxu0 %v722
        %v789 = vpop.f32.mrf.mxu0
        %v790 = vadd.f32 0.0, %v789
        %v791 = vpop.f32.mrf.mxu0
        %792 = vdwg.mxu0
        %v793 = vmul.f32 %v790, 0.0009765625
        %v794 = vadd.f32 %v793, 1e-05
        %v795 = vrsqrt.pop %v794
        %v796 = vlaneseq
        %v797 = vshrl.u32 %v796, 7
        %v798 = vsub.s32 0, %v797
        %v799 = vrot.slane %v795, %v798
        %v800 = vmul.f32 %v712, %v799
        %v801 = vmul.f32 %v713, %v799
        %v802 = vlaneseq
        %v803 = vshrl.u32 %v802, 7
        %v804 = vsub.s32 0, %v803
        %v805 = vrot.slane %v321, %v804
        %v806 = vmul.f32 %v800, %v805
        %v807 = vmul.f32 %v801, %v805
        %v808 = vlaneseq
        %v809 = vshrl.u32 %v808, 7
        %v810 = vsub.s32 0, %v809
        %v811 = vrot.slane %v322, %v810
        %v812 = vadd.f32 %v806, %v811
        %v813 = vadd.f32 %v807, %v811
        %v814 = vmax.f32 %v812, 0.0
        %v815 = vmax.f32 %v813, 0.0
        %v816 = vlaneseq
        %v817 = vshrl.u32 %v816, 7
        %v818 = vsub.s32 0, %v817
        %v819 = vrot.slane %v323, %v818
        %v820 = vld [vmem:[#allocation7] sm:$0xff]
        %v821 = vld [vmem:[#allocation7 + $0x18] sm:$0xff]
        %v822 = vld [vmem:[#allocation7 + $0x30] sm:$0xff]
        %v823 = vld [vmem:[#allocation7 + $0x48] sm:$0xff]
        %v824 = vld [vmem:[#allocation7 + $0x60] sm:$0xff]
        %v825 = vld [vmem:[#allocation7 + $0x78] sm:$0xff]
        %v826 = vld [vmem:[#allocation7 + $0x90] sm:$0xff]
        %v827 = vld [vmem:[#allocation7 + $0xa8] sm:$0xff]
        %v828 = vld [vmem:[#allocation7 + $0xc0] sm:$0xff]
        %v829 = vld [vmem:[#allocation7 + $0xd8] sm:$0xff]
        %v830 = vld [vmem:[#allocation7 + $0xf0] sm:$0xff]
        %v831 = vld [vmem:[#allocation7 + $0x108] sm:$0xff]
        %v832 = vld [vmem:[#allocation7 + $0x120] sm:$0xff]
        %v833 = vld [vmem:[#allocation7 + $0x138] sm:$0xff]
        %v834 = vld [vmem:[#allocation7 + $0x150] sm:$0xff]
        %v835 = vld [vmem:[#allocation7 + $0x168] sm:$0xff]
        %836 = vmatprep.subr.mxu0 0.0
        %837 = vmatpush1.msra.mxu0 %v835
        %838 = vmatprep.subr.mxu0 0.0
        %839 = vmatpush1.msra.mxu0 %v834
        %840 = vmatprep.subr.mxu0 0.0
        %841 = vmatpush1.msra.mxu0 %v833
        %842 = vmatprep.subr.mxu0 0.0
        %843 = vmatpush1.msra.mxu0 %v832
        %844 = vmatprep.subr.mxu0 0.0
        %845 = vmatpush1.msra.mxu0 %v831
        %846 = vmatprep.subr.mxu0 0.0
        %847 = vmatpush1.msra.mxu0 %v830
        %848 = vmatprep.subr.mxu0 0.0
        %849 = vmatpush1.msra.mxu0 %v829
        %850 = vmatprep.subr.mxu0 0.0
        %851 = vmatpush1.msra.mxu0 %v828
        %852 = vmatprep.subr.mxu0 0.0
        %853 = vmatpush1.msra.mxu0 %v827
        %854 = vmatprep.subr.mxu0 0.0
        %855 = vmatpush1.msra.mxu0 %v826
        %856 = vmatprep.subr.mxu0 0.0
        %857 = vmatpush1.msra.mxu0 %v825
        %858 = vmatprep.subr.mxu0 0.0
        %859 = vmatpush1.msra.mxu0 %v824
        %860 = vmatprep.subr.mxu0 0.0
        %861 = vmatpush1.msra.mxu0 %v823
        %862 = vmatprep.subr.mxu0 0.0
        %863 = vmatpush1.msra.mxu0 %v822
        %864 = vmatprep.subr.mxu0 0.0
        %865 = vmatpush1.msra.mxu0 %v821
        %866 = vmatprep.subr.mxu0 0.0
        %867 = vmatpush1.msra.mxu0 %v820
        %868 = vmatprep.subr.mxu0 0.0
        %869 = vmatpush2.msra.mxu0 0.0
        %870 = vmatprep.subr.mxu0 0.0
        %871 = vmatpush2.msra.mxu0 0.0
        %872 = vmatprep.subr.mxu0 0.0
        %873 = vmatpush2.msra.mxu0 0.0
        %874 = vmatprep.subr.mxu0 0.0
        %875 = vmatpush2.msra.mxu0 0.0
        %876 = vmatprep.subr.mxu0 0.0
        %877 = vmatpush2.msra.mxu0 0.0
        %878 = vmatprep.subr.mxu0 0.0
        %879 = vmatpush2.msra.mxu0 0.0
        %880 = vmatprep.subr.mxu0 0.0
        %881 = vmatpush2.msra.mxu0 0.0
        %882 = vmatprep.subr.mxu0 0.0
        %883 = vmatpush2.msra.mxu0 0.0
        %884 = vmatprep.subr.mxu0 0.0
        %885 = vmatpush2.msra.mxu0 0.0
        %886 = vmatprep.subr.mxu0 0.0
        %887 = vmatpush2.msra.mxu0 0.0
        %888 = vmatprep.subr.mxu0 0.0
        %889 = vmatpush2.msra.mxu0 0.0
        %890 = vmatprep.subr.mxu0 0.0
        %891 = vmatpush2.msra.mxu0 0.0
        %892 = vmatprep.subr.mxu0 0.0
        %893 = vmatpush2.msra.mxu0 0.0
        %894 = vmatprep.subr.mxu0 0.0
        %895 = vmatpush2.msra.mxu0 0.0
        %896 = vmatprep.subr.mxu0 0.0
        %897 = vmatpush2.msra.mxu0 0.0
        %898 = vmatprep.subr.mxu0 0.0
        %899 = vmatpush2.msra.mxu0 0.0
        %900 = vmatprep.mubr.f32.mxu0 0.0
        %901 = vmatmul.mubr.f32.gmra.mxu0 %v814
        %v902 = vpop.f32.mrf.mxu0
        %v903 = vadd.f32 0.0, %v902
        %v904 = vpop.f32.mrf.mxu0
        %905 = vmatprep.mubr.f32.mxu0 0.0
        %906 = vmatmul.mubr.f32.gmra.mxu0 %v815
        %v907 = vpop.f32.mrf.mxu0
        %v908 = vadd.f32 0.0, %v907
        %v909 = vpop.f32.mrf.mxu0
        %910 = vdwg.mxu0
        %v911 = vrot.slane %v903, 7
        %v912 = vrot.slane %v908, 7
        %v913 = vsel %vm422, %v911, %v912
        %v914 = vsel %vm422, %v912, %v911
        %v915 = vsel %vm427, %v914, 0.0
        %v916 = vsel %vm428, %v913, 0.0
        %v917 = vadd.f32 %v819, %v915
        %v918 = vadd.f32 %v819, %v916
        %v919 = vld [vmem:[#allocation7 + $0x8] sm:$0xff]
        %v920 = vld [vmem:[#allocation7 + $0x20] sm:$0xff]
        %v921 = vld [vmem:[#allocation7 + $0x38] sm:$0xff]
        %v922 = vld [vmem:[#allocation7 + $0x50] sm:$0xff]
        %v923 = vld [vmem:[#allocation7 + $0x68] sm:$0xff]
        %v924 = vld [vmem:[#allocation7 + $0x80] sm:$0xff]
        %v925 = vld [vmem:[#allocation7 + $0x98] sm:$0xff]
        %v926 = vld [vmem:[#allocation7 + $0xb0] sm:$0xff]
        %v927 = vld [vmem:[#allocation7 + $0xc8] sm:$0xff]
        %v928 = vld [vmem:[#allocation7 + $0xe0] sm:$0xff]
        %v929 = vld [vmem:[#allocation7 + $0xf8] sm:$0xff]
        %v930 = vld [vmem:[#allocation7 + $0x110] sm:$0xff]
        %v931 = vld [vmem:[#allocation7 + $0x128] sm:$0xff]
        %v932 = vld [vmem:[#allocation7 + $0x140] sm:$0xff]
        %v933 = vld [vmem:[#allocation7 + $0x158] sm:$0xff]
        %v934 = vld [vmem:[#allocation7 + $0x170] sm:$0xff]
        %935 = vmatprep.subr.mxu0 0.0
        %936 = vmatpush1.msra.mxu0 %v934
        %937 = vmatprep.subr.mxu0 0.0
        %938 = vmatpush1.msra.mxu0 %v933
        %939 = vmatprep.subr.mxu0 0.0
        %940 = vmatpush1.msra.mxu0 %v932
        %941 = vmatprep.subr.mxu0 0.0
        %942 = vmatpush1.msra.mxu0 %v931
        %943 = vmatprep.subr.mxu0 0.0
        %944 = vmatpush1.msra.mxu0 %v930
        %945 = vmatprep.subr.mxu0 0.0
        %946 = vmatpush1.msra.mxu0 %v929
        %947 = vmatprep.subr.mxu0 0.0
        %948 = vmatpush1.msra.mxu0 %v928
        %949 = vmatprep.subr.mxu0 0.0
        %950 = vmatpush1.msra.mxu0 %v927
        %951 = vmatprep.subr.mxu0 0.0
        %952 = vmatpush1.msra.mxu0 %v926
        %953 = vmatprep.subr.mxu0 0.0
        %954 = vmatpush1.msra.mxu0 %v925
        %955 = vmatprep.subr.mxu0 0.0
        %956 = vmatpush1.msra.mxu0 %v924
        %957 = vmatprep.subr.mxu0 0.0
        %958 = vmatpush1.msra.mxu0 %v923
        %959 = vmatprep.subr.mxu0 0.0
        %960 = vmatpush1.msra.mxu0 %v922
        %961 = vmatprep.subr.mxu0 0.0
        %962 = vmatpush1.msra.mxu0 %v921
        %963 = vmatprep.subr.mxu0 0.0
        %964 = vmatpush1.msra.mxu0 %v920
        %965 = vmatprep.subr.mxu0 0.0
        %966 = vmatpush1.msra.mxu0 %v919
        %967 = vmatprep.subr.mxu0 0.0
        %968 = vmatpush2.msra.mxu0 0.0
        %969 = vmatprep.subr.mxu0 0.0
        %970 = vmatpush2.msra.mxu0 0.0
        %971 = vmatprep.subr.mxu0 0.0
        %972 = vmatpush2.msra.mxu0 0.0
        %973 = vmatprep.subr.mxu0 0.0
        %974 = vmatpush2.msra.mxu0 0.0
        %975 = vmatprep.subr.mxu0 0.0
        %976 = vmatpush2.msra.mxu0 0.0
        %977 = vmatprep.subr.mxu0 0.0
        %978 = vmatpush2.msra.mxu0 0.0
        %979 = vmatprep.subr.mxu0 0.0
        %980 = vmatpush2.msra.mxu0 0.0
        %981 = vmatprep.subr.mxu0 0.0
        %982 = vmatpush2.msra.mxu0 0.0
        %983 = vmatprep.subr.mxu0 0.0
        %984 = vmatpush2.msra.mxu0 0.0
        %985 = vmatprep.subr.mxu0 0.0
        %986 = vmatpush2.msra.mxu0 0.0
        %987 = vmatprep.subr.mxu0 0.0
        %988 = vmatpush2.msra.mxu0 0.0
        %989 = vmatprep.subr.mxu0 0.0
        %990 = vmatpush2.msra.mxu0 0.0
        %991 = vmatprep.subr.mxu0 0.0
        %992 = vmatpush2.msra.mxu0 0.0
        %993 = vmatprep.subr.mxu0 0.0
        %994 = vmatpush2.msra.mxu0 0.0
        %995 = vmatprep.subr.mxu0 0.0
        %996 = vmatpush2.msra.mxu0 0.0
        %997 = vmatprep.subr.mxu0 0.0
        %998 = vmatpush2.msra.mxu0 0.0
        %999 = vmatprep.mubr.f32.mxu0 0.0
        %1000 = vmatmul.mubr.f32.gmra.mxu0 %v814
        %v1001 = vpop.f32.mrf.mxu0
        %v1002 = vadd.f32 0.0, %v1001
        %v1003 = vpop.f32.mrf.mxu0
        %1004 = vmatprep.mubr.f32.mxu0 0.0
        %1005 = vmatmul.mubr.f32.gmra.mxu0 %v815
        %v1006 = vpop.f32.mrf.mxu0
        %v1007 = vadd.f32 0.0, %v1006
        %v1008 = vpop.f32.mrf.mxu0
        %1009 = vdwg.mxu0
        %v1010 = vadd.f32 %v917, %v1002
        %v1011 = vadd.f32 %v918, %v1007
        %v1012 = vld [vmem:[#allocation7 + $0x10] sm:$0xff]
        %v1013 = vld [vmem:[#allocation7 + $0x28] sm:$0xff]
        %v1014 = vld [vmem:[#allocation7 + $0x40] sm:$0xff]
        %v1015 = vld [vmem:[#allocation7 + $0x58] sm:$0xff]
        %v1016 = vld [vmem:[#allocation7 + $0x70] sm:$0xff]
        %v1017 = vld [vmem:[#allocation7 + $0x88] sm:$0xff]
        %v1018 = vld [vmem:[#allocation7 + $0xa0] sm:$0xff]
        %v1019 = vld [vmem:[#allocation7 + $0xb8] sm:$0xff]
        %v1020 = vld [vmem:[#allocation7 + $0xd0] sm:$0xff]
        %v1021 = vld [vmem:[#allocation7 + $0xe8] sm:$0xff]
        %v1022 = vld [vmem:[#allocation7 + $0x100] sm:$0xff]
        %v1023 = vld [vmem:[#allocation7 + $0x118] sm:$0xff]
        %v1024 = vld [vmem:[#allocation7 + $0x130] sm:$0xff]
        %v1025 = vld [vmem:[#allocation7 + $0x148] sm:$0xff]
        %v1026 = vld [vmem:[#allocation7 + $0x160] sm:$0xff]
        %v1027 = vld [vmem:[#allocation7 + $0x178] sm:$0xff]
        %1028 = vmatprep.subr.mxu0 0.0
        %1029 = vmatpush1.msra.mxu0 %v1027
        %1030 = vmatprep.subr.mxu0 0.0
        %1031 = vmatpush1.msra.mxu0 %v1026
        %1032 = vmatprep.subr.mxu0 0.0
        %1033 = vmatpush1.msra.mxu0 %v1025
        %1034 = vmatprep.subr.mxu0 0.0
        %1035 = vmatpush1.msra.mxu0 %v1024
        %1036 = vmatprep.subr.mxu0 0.0
        %1037 = vmatpush1.msra.mxu0 %v1023
        %1038 = vmatprep.subr.mxu0 0.0
        %1039 = vmatpush1.msra.mxu0 %v1022
        %1040 = vmatprep.subr.mxu0 0.0
        %1041 = vmatpush1.msra.mxu0 %v1021
        %1042 = vmatprep.subr.mxu0 0.0
        %1043 = vmatpush1.msra.mxu0 %v1020
        %1044 = vmatprep.subr.mxu0 0.0
        %1045 = vmatpush1.msra.mxu0 %v1019
        %1046 = vmatprep.subr.mxu0 0.0
        %1047 = vmatpush1.msra.mxu0 %v1018
        %1048 = vmatprep.subr.mxu0 0.0
        %1049 = vmatpush1.msra.mxu0 %v1017
        %1050 = vmatprep.subr.mxu0 0.0
        %1051 = vmatpush1.msra.mxu0 %v1016
        %1052 = vmatprep.subr.mxu0 0.0
        %1053 = vmatpush1.msra.mxu0 %v1015
        %1054 = vmatprep.subr.mxu0 0.0
        %1055 = vmatpush1.msra.mxu0 %v1014
        %1056 = vmatprep.subr.mxu0 0.0
        %1057 = vmatpush1.msra.mxu0 %v1013
        %1058 = vmatprep.subr.mxu0 0.0
        %1059 = vmatpush1.msra.mxu0 %v1012
        %1060 = vmatprep.subr.mxu0 0.0
        %1061 = vmatpush2.msra.mxu0 0.0
        %1062 = vmatprep.subr.mxu0 0.0
        %1063 = vmatpush2.msra.mxu0 0.0
        %1064 = vmatprep.subr.mxu0 0.0
        %1065 = vmatpush2.msra.mxu0 0.0
        %1066 = vmatprep.subr.mxu0 0.0
        %1067 = vmatpush2.msra.mxu0 0.0
        %1068 = vmatprep.subr.mxu0 0.0
        %1069 = vmatpush2.msra.mxu0 0.0
        %1070 = vmatprep.subr.mxu0 0.0
        %1071 = vmatpush2.msra.mxu0 0.0
        %1072 = vmatprep.subr.mxu0 0.0
        %1073 = vmatpush2.msra.mxu0 0.0
        %1074 = vmatprep.subr.mxu0 0.0
        %1075 = vmatpush2.msra.mxu0 0.0
        %1076 = vmatprep.subr.mxu0 0.0
        %1077 = vmatpush2.msra.mxu0 0.0
        %1078 = vmatprep.subr.mxu0 0.0
        %1079 = vmatpush2.msra.mxu0 0.0
        %1080 = vmatprep.subr.mxu0 0.0
        %1081 = vmatpush2.msra.mxu0 0.0
        %1082 = vmatprep.subr.mxu0 0.0
        %1083 = vmatpush2.msra.mxu0 0.0
        %1084 = vmatprep.subr.mxu0 0.0
        %1085 = vmatpush2.msra.mxu0 0.0
        %1086 = vmatprep.subr.mxu0 0.0
        %1087 = vmatpush2.msra.mxu0 0.0
        %1088 = vmatprep.subr.mxu0 0.0
        %1089 = vmatpush2.msra.mxu0 0.0
        %1090 = vmatprep.subr.mxu0 0.0
        %1091 = vmatpush2.msra.mxu0 0.0
        %1092 = vmatprep.mubr.f32.mxu0 0.0
        %1093 = vmatmul.mubr.f32.gmra.mxu0 %v814
        %v1094 = vpop.f32.mrf.mxu0
        %v1095 = vadd.f32 0.0, %v1094
        %v1096 = vpop.f32.mrf.mxu0
        %1097 = vmatprep.mubr.f32.mxu0 0.0
        %1098 = vmatmul.mubr.f32.gmra.mxu0 %v815
        %v1099 = vpop.f32.mrf.mxu0
        %v1100 = vadd.f32 0.0, %v1099
        %v1101 = vpop.f32.mrf.mxu0
        %1102 = vdwg.mxu0
        %v1103 = vrot.slane %v1095, 1
        %v1104 = vrot.slane %v1100, 1
        %v1105 = vsel %vm603, %v1103, %v1104
        %v1106 = vsel %vm603, %v1104, %v1103
        %v1107 = vsel %vm608, %v1105, 0.0
        %v1108 = vsel %vm609, %v1106, 0.0
        %v1109 = vadd.f32 %v1010, %v1107
        %v1110 = vadd.f32 %v1011, %v1108
        %v1111 = vmax.f32 %v1109, 0.0
        %v1112 = vmax.f32 %v1110, 0.0
        %1113 = vst [vmem:[%s286] sm:$0xff] %v1111
        %1114 = vst [vmem:[%s286 + $0x8] sm:$0xff] %v1112
        %s1115 = sand.u32 %s142, 1
        %s1116 = scalar_lea.sflag [#allocation4], %s1115
        %s1117 = sand.u32 %s142, 1
        %s1118 = smul.addr %s1117, 16
        %s1119 = scalar_lea.vmem [#allocation10], %s1118
        // Predicated region
        $region57: #{tpu_custom_call.1} parent=39 // pred_check
          %p1120 = pneg %p152
        $region58: #{tpu_custom_call.1} parent=39 // pred_check_branch
          %1122 = sbr.rel (%p1120) target = $region60
        $region59: #{tpu_custom_call.1} parent=39 // pred_region
          %s1123 = smul.u32 2, %s24
          %s1125 = ssub.s32 256, 256
          %1126 = vsyncadd %s1116, %s1125
          %s1127 = smul.addr %s1123, 128
          %s1128 = scalar_lea.hbm %s5, %s1127
          %s1129 = sshll.u32 %s1119, 4
          %s1130 = int_to_ptr.vmem [resolvable:$true] %s1129
          %1135 = dma.vmem_to_hbm [thread:$0]  %s1130, 256, %s1128, %s1116, 128, 128, 8
        $region60: #{tpu_custom_call.1} parent=39 // pred_fallthru
          _
      $region40: #{tpu_custom_call.1} parent=5 // pred_fallthru
        _
      %p1136 = scmp.le.s32.totalorder 2, %s19
      // Predicated region
      $region61: #{tpu_custom_call.1} parent=5 // pred_check
        %p1137 = pneg %p1136
      $region62: #{tpu_custom_call.1} parent=5 // pred_check_branch
        %1139 = sbr.rel (%p1137) target = $region64
      $region63: #{tpu_custom_call.1} parent=5 // pred_region
        %s1140 = ssub.s32 %s19, 2
        // Predicated region
        $region65: #{tpu_custom_call.1} parent=63 // pred_check
          %p1141 = pneg %p158
        $region66: #{tpu_custom_call.1} parent=63 // pred_check_branch
          %1143 = sbr.rel (%p1141) target = $region68
        $region67: #{tpu_custom_call.1} parent=63 // pred_region
          %s1144 = sand.u32 %s143, 1
          %s1145 = scalar_lea.sflag [#allocation4], %s1144
          %s1146 = sand.u32 %s143, 1
          %s1147 = smul.addr %s1146, 16
          %s1148 = scalar_lea.vmem [#allocation10], %s1147
          %1149 = dma.done %s1145, 256
        $region68: #{tpu_custom_call.1} parent=63 // pred_fallthru
          _
      $region64: #{tpu_custom_call.1} parent=5 // pred_fallthru
        _
    $region6: #{tpu_custom_call.1} parent=1 // loop_footer
      %s23 = sadd.s32 1, %s19
    $region7: #{tpu_custom_call.1} parent=1 // loop_footer_branch
      %18 = sbr.rel target = $region3
    $region8: #{tpu_custom_call.1} parent=1 // loop_exit
      _
    %1150 = vsyncpa [#allocation3], 1
    %s1151 = scalar_lea.sflag [#allocation3], 1
    %1152 = vsyncpa %s1151, 1
    %1153 = vsyncpa [#allocation6], 1
    %1154 = vsyncpa [#allocation9], 1
    %1155 = vsyncpa [#allocation4], 1
    %s1156 = scalar_lea.sflag [#allocation4], 1
    %1157 = vsyncpa %s1156, 1

</llo_original>
